<compile_context>
chip_gen: v5e
topology: v5e:2x2
jax: 0.10.0
libtpu: 0.0.40
codegen_flags: <defaults>
</compile_context>

<pallas_src>
import math

import jax
import jax.numpy as jnp
from jax import lax
from jax.experimental import pallas as pl
from jax.experimental.pallas import tpu as pltpu


# --------------------------- tiling helpers -----------------------------------


def _pick_nt_tile(nt: int, d_in: int, nr_nh: int,
                  target: int = 1024, vmem_budget: int = 48 << 20):
    """Choose the tail tile TT and padded tail length.

    Returns (TT, NT_pad) with TT | NT_pad.  When tiling is needed TT is a
    multiple of 128 (unmasked lane-dense stores) and is capped so that the
    double-buffered t tile (bf16) + output slab (f32) fit the VMEM budget
    (keeps v7x's 64 MiB/TC comfortable).  Small NT -> single full block.
    """
    if nt <= target:
        return nt, nt
    per_tt = 2 * (d_in * 2 + nr_nh * 4)          # double-buffered bytes per tail row
    max_tt = max(128, (vmem_budget // max(per_tt, 1)) // 128 * 128)
    tt = max(128, min(target // 128 * 128, max_tt))
    nt_pad = ((nt + tt - 1) // tt) * tt
    return tt, nt_pad


# --------------------------- Pallas kernel ------------------------------------


def _fused_literal_distmult_kernel(h_ref, r_ref, t_ref, w_ref, b_ref, o_ref):
    """Fused combination + DistMult for one (batch, NT-tile) grid point.

    h_ref: (1, NH, d_in)   bf16  raw head entity||literal features
    r_ref: (1, NR, D)      f32   relation embeddings
    t_ref: (1, TT, d_in)   bf16  raw tail entity||literal features (one NT tile)
    w_ref: (d_in, D)       bf16  combination Linear weight (pre-transposed)
    b_ref: (1, D)          f32   combination Linear bias
    o_ref: (1, NR*NH, TT)  f32   lane-dense score slab, rows ordered (r-major, h-minor)
    """
    w = w_ref[...]          # (d_in, D) bf16, VMEM-resident
    bias = b_ref[...]       # (1, D)    f32

    # Fused combination: tanh(x @ W^T + b).  bf16 MXU operands, f32 accumulate,
    # f32 bias add + tanh.  h is recomputed per NT tile (negligible cost) so both
    # grid axes stay independent ("parallel").
    h_proj = jnp.tanh(
        jnp.dot(h_ref[0], w, preferred_element_type=jnp.float32) + bias
    )  # (NH, D) f32
    t_proj = jnp.tanh(
        jnp.dot(t_ref[0], w, preferred_element_type=jnp.float32) + bias
    )  # (TT, D) f32

    r_all = r_ref[0]                    # (NR, D) f32
    nh = h_proj.shape[0]
    nr = r_all.shape[0]
    d = h_proj.shape[1]

    # Batched relation*head product: (NR, NH, D) -> (NR*NH, D), built once on the
    # VPU in f32, cast to bf16 once.
    hr_all = (r_all[:, None, :] * h_proj[None, :, :]).reshape(nr * nh, d)

    # Single MXU matmul contracting the feature dim of BOTH operands -> no
    # in-kernel transpose of the (TT, D) tile.  One dense unmasked slab store.
    s = lax.dot_general(
        hr_all.astype(jnp.bfloat16), t_proj.astype(jnp.bfloat16),
        dimension_numbers=(((1,), (1,)), ((), ())),
        preferred_element_type=jnp.float32,
    )  # (NR*NH, TT) f32
    o_ref[0] = s


# ------------------------------ wrapper ----------------------------------------


def literal_interaction_forward(h_ent, h_lit, r, t_ent, t_lit, w, b,
                                *, nt_tile_target=1024):
    """Forward of LiteralInteraction(base=DistMult, combination=tanh∘Linear).

    Args follow the canonical pykeen broadcast shapes (see module docstring).
    Returns scores of shape (B, NH, NR, NT) in float32.
    """
    B, NH = h_ent.shape[0], h_ent.shape[1]
    NR = r.shape[2]
    NT = t_ent.shape[3]
    d_e = h_ent.shape[-1]
    d_lit = h_lit.shape[-1]
    d_r = r.shape[-1]
    d_out, d_in = w.shape
    assert d_in == d_e + d_lit and d_r == d_out

    # Glue (layout only): squeeze broadcast singletons, concat entity||literal.
    # Streamed / matmul operands are bf16; relation & bias stay f32.
    h_cat = jnp.concatenate(
        [h_ent.reshape(B, NH, d_e), h_lit.reshape(B, NH, d_lit)], axis=-1
    ).astype(jnp.bfloat16)
    t_cat = jnp.concatenate(
        [t_ent.reshape(B, NT, d_e), t_lit.reshape(B, NT, d_lit)], axis=-1
    ).astype(jnp.bfloat16)
    r_sq = r.reshape(B, NR, d_r).astype(jnp.float32)
    wt = jnp.asarray(w.T, jnp.bfloat16)           # PyTorch Linear: x @ W^T + b
    b2 = jnp.asarray(b.reshape(1, d_out), jnp.float32)

    # Tile (and, if needed, pad) the potentially large tail axis.  h/r/W/b stay
    # VMEM-resident across NT tiles; only the t tile + output slab stream.
    # TODO(synk): also tile NH for the score_h case with very large num_heads.
    # TODO(synk): batch-shared-tails fast path (cache t_proj across the batch
    #             axis when tails are broadcast over B, typical 1:N scoring).
    TT, NT_pad = _pick_nt_tile(NT, d_in, NR * NH, target=nt_tile_target)
    if NT_pad != NT:
        t_cat = jnp.pad(t_cat, ((0, 0), (0, NT_pad - NT), (0, 0)))
    n_nt = NT_pad // TT

    # Explicit VMEM budget: double-buffered t tile (bf16) + output slab (f32)
    # + resident h/r/W/b, with headroom.
    est = (2 * (TT * d_in * 2 + NR * NH * TT * 4)
           + 2 * (NH * d_in * 2 + NR * d_out * 4 + d_in * d_out * 2 + d_out * 4))
    vmem_limit = int(min(100 << 20, max(2 * est + (4 << 20), 16 << 20)))

    scores_flat = pl.pallas_call(
        _fused_literal_distmult_kernel,
        out_shape=jax.ShapeDtypeStruct((B, NR * NH, NT_pad), jnp.float32),
        grid=(B, n_nt),
        in_specs=[
            pl.BlockSpec((1, NH, d_in), lambda bi, ti: (bi, 0, 0)),   # h: NT-invariant
            pl.BlockSpec((1, NR, d_out), lambda bi, ti: (bi, 0, 0)),  # r: NT-invariant
            pl.BlockSpec((1, TT, d_in), lambda bi, ti: (bi, ti, 0)),  # t: streams
            pl.BlockSpec((d_in, d_out), lambda bi, ti: (0, 0)),       # W: resident
            pl.BlockSpec((1, d_out), lambda bi, ti: (0, 0)),          # b: resident
        ],
        out_specs=pl.BlockSpec((1, NR * NH, TT), lambda bi, ti: (bi, 0, ti)),
        compiler_params=pltpu.CompilerParams(
            dimension_semantics=("parallel", "parallel"),
            vmem_limit_bytes=vmem_limit),
    )(h_cat, r_sq, t_cat, wt, b2)

    # Lane-dense slab -> canonical (B, NH, NR, NT); layout plumbing only.
    scores_flat = scores_flat[:, :, :NT]
    return jnp.swapaxes(scores_flat.reshape(B, NR, NH, NT), 1, 2)


# --------------------------- pure-JAX reference ---------------------------------


def _reference(h_ent, h_lit, r, t_ent, t_lit, w, b):
    B, NH = h_ent.shape[0], h_ent.shape[1]
    NR = r.shape[2]
    NT = t_ent.shape[3]
    d_out = w.shape[0]
    h_cat = jnp.concatenate([h_ent, h_lit], axis=-1)
    t_cat = jnp.concatenate([t_ent, t_lit], axis=-1)
    h_proj = jnp.tanh(h_cat @ w.T + b)          # (B, NH, 1, 1, d_out)
    t_proj = jnp.tanh(t_cat @ w.T + b)          # (B, 1, 1, NT, d_out)
    return jnp.einsum(
        "bhd,brd,btd->bhrt",
        h_proj.reshape(B, NH, d_out),
        r.reshape(B, NR, d_out),
        t_proj.reshape(B, NT, d_out),
    )


# ------------------------------------ main --------------------------------------


if __name__ == "__main__":
    key = jax.random.PRNGKey(0)
    B, NH, NR, NT = 2, 4, 4, 4
    d_e, d_lit, d_out = 32, 8, 32          # d_r == d_out for DistMult
    d_in = d_e + d_lit

    k = jax.random.split(key, 7)
    h_ent = jax.random.normal(k[0], (B, NH, 1, 1, d_e), jnp.float32)
    h_lit = jax.random.normal(k[1], (B, NH, 1, 1, d_lit), jnp.float32)
    r_emb = jax.random.normal(k[2], (B, 1, NR, 1, d_out), jnp.float32)
    t_ent = jax.random.normal(k[3], (B, 1, 1, NT, d_e), jnp.float32)
    t_lit = jax.random.normal(k[4], (B, 1, 1, NT, d_lit), jnp.float32)

    # Deterministic synthetic parameters for the combination's Linear layer
    # (same shapes as torch.nn.Linear(d_e + d_lit, d_out)).
    bound = 1.0 / (d_in ** 0.5)
    w = jax.random.uniform(k[5], (d_out, d_in), jnp.float32, -bound, bound)
    b = jax.random.uniform(k[6], (d_out,), jnp.float32, -bound, bound)

    scores = literal_interaction_forward(h_ent, h_lit, r_emb, t_ent, t_lit, w, b)
    scores = jax.block_until_ready(scores)

    ref = _reference(h_ent, h_lit, r_emb, t_ent, t_lit, w, b)
    assert scores.shape == (B, NH, NR, NT)
    # Tolerance derived from the contraction lengths: bf16 unit roundoff (2^-8)
    # accumulated over the combination (d_in) and scoring (d_out) contractions.
    tol = 8.0 * (2.0 ** -8) * math.sqrt(d_in + d_out)
    assert jnp.allclose(scores, ref, rtol=2e-2, atol=tol), (
        float(jnp.max(jnp.abs(scores - ref))))

    print("KERNEL_OK")
</pallas_src>

<mosaic_0001>
module attributes {stable_mosaic.version = 11 : i64} {
  func.func @_fused_literal_distmult_kernel(%arg0: i32, %arg1: i32, %arg2: memref<1x4x40xbf16, #tpu.memory_space<vmem>>, %arg3: memref<1x4x32xf32, #tpu.memory_space<vmem>>, %arg4: memref<1x4x40xbf16, #tpu.memory_space<vmem>>, %arg5: memref<40x32xbf16, #tpu.memory_space<vmem>>, %arg6: memref<1x32xf32, #tpu.memory_space<vmem>>, %arg7: memref<1x16x4xf32, #tpu.memory_space<vmem>>) attributes {dimension_semantics = [#tpu.dimension_semantics<parallel>, #tpu.dimension_semantics<parallel>], iteration_bounds = array<i64: 2, 1>, scalar_prefetch = 0 : i64, scratch_operands = 0 : i64, tpu.core_type = #tpu.core_type<tc>, window_params = [{transform_indices = @transform_0, window_bounds = array<i64: 1, 4, 40>}, {transform_indices = @transform_1, window_bounds = array<i64: 1, 4, 32>}, {transform_indices = @transform_2, window_bounds = array<i64: 1, 4, 40>}, {pipeline_mode = #tpu.pipeline_mode<synchronous>, transform_indices = @transform_3, window_bounds = array<i64: 40, 32>}, {pipeline_mode = #tpu.pipeline_mode<synchronous>, transform_indices = @transform_4, window_bounds = array<i64: 1, 32>}, {transform_indices = @transform_5, window_bounds = array<i64: 1, 16, 4>}]} {
    %c0 = arith.constant 0 : index
    %c0_0 = arith.constant 0 : index
    %0 = vector.load %arg5[%c0, %c0_0] : memref<40x32xbf16, #tpu.memory_space<vmem>>, vector<40x32xbf16>
    %c0_1 = arith.constant 0 : index
    %c0_2 = arith.constant 0 : index
    %1 = vector.load %arg6[%c0_1, %c0_2] : memref<1x32xf32, #tpu.memory_space<vmem>>, vector<1x32xf32>
    %c0_3 = arith.constant 0 : index
    %c0_4 = arith.constant 0 : index
    %c0_5 = arith.constant 0 : index
    %2 = vector.load %arg2[%c0_3, %c0_4, %c0_5] : memref<1x4x40xbf16, #tpu.memory_space<vmem>>, vector<1x4x40xbf16>
    %3 = vector.shape_cast %2 : vector<1x4x40xbf16> to vector<4x40xbf16>
    %cst = arith.constant dense<0.000000e+00> : vector<4x32xf32>
    %4 = tpu.matmul %3, %0, %cst {dimension_numbers = #tpu.dot_dimension_numbers<[1], [0], [0], [1], [0, 0, 1, 1], [], []>} : vector<4x40xbf16>, vector<40x32xbf16>, vector<4x32xf32> -> vector<4x32xf32>
    %5 = vector.broadcast %1 : vector<1x32xf32> to vector<4x32xf32>
    %6 = arith.addf %4, %5 : vector<4x32xf32>
    %7 = math.tanh %6 : vector<4x32xf32>
    %c0_6 = arith.constant 0 : index
    %c0_7 = arith.constant 0 : index
    %c0_8 = arith.constant 0 : index
    %8 = vector.load %arg4[%c0_6, %c0_7, %c0_8] : memref<1x4x40xbf16, #tpu.memory_space<vmem>>, vector<1x4x40xbf16>
    %9 = vector.shape_cast %8 : vector<1x4x40xbf16> to vector<4x40xbf16>
    %cst_9 = arith.constant dense<0.000000e+00> : vector<4x32xf32>
    %10 = tpu.matmul %9, %0, %cst_9 {dimension_numbers = #tpu.dot_dimension_numbers<[1], [0], [0], [1], [0, 0, 1, 1], [], []>} : vector<4x40xbf16>, vector<40x32xbf16>, vector<4x32xf32> -> vector<4x32xf32>
    %11 = vector.broadcast %1 : vector<1x32xf32> to vector<4x32xf32>
    %12 = arith.addf %10, %11 : vector<4x32xf32>
    %13 = math.tanh %12 : vector<4x32xf32>
    %c0_10 = arith.constant 0 : index
    %c0_11 = arith.constant 0 : index
    %c0_12 = arith.constant 0 : index
    %14 = vector.load %arg3[%c0_10, %c0_11, %c0_12] : memref<1x4x32xf32, #tpu.memory_space<vmem>>, vector<1x4x32xf32>
    %15 = vector.shape_cast %14 : vector<1x4x32xf32> to vector<4x32xf32>
    %16 = vector.shape_cast %15 : vector<4x32xf32> to vector<4x1x32xf32>
    %17 = vector.shape_cast %7 : vector<4x32xf32> to vector<1x4x32xf32>
    %18 = vector.broadcast %16 : vector<4x1x32xf32> to vector<4x4x32xf32>
    %19 = vector.broadcast %17 : vector<1x4x32xf32> to vector<4x4x32xf32>
    %20 = arith.mulf %18, %19 : vector<4x4x32xf32>
    %21 = vector.shape_cast %20 : vector<4x4x32xf32> to vector<16x32xf32>
    %22 = arith.truncf %21 : vector<16x32xf32> to vector<16x32xbf16>
    %23 = arith.truncf %13 : vector<4x32xf32> to vector<4x32xbf16>
    %cst_13 = arith.constant dense<0.000000e+00> : vector<16x4xf32>
    %24 = tpu.matmul %22, %23, %cst_13 {dimension_numbers = #tpu.dot_dimension_numbers<[1], [1], [0], [0], [0, 0, 1, 0], [], []>} : vector<16x32xbf16>, vector<4x32xbf16>, vector<16x4xf32> -> vector<16x4xf32>
    %c0_14 = arith.constant 0 : index
    %c0_15 = arith.constant 0 : index
    %c0_16 = arith.constant 0 : index
    %25 = vector.load %arg7[%c0_14, %c0_15, %c0_16] : memref<1x16x4xf32, #tpu.memory_space<vmem>>, vector<1x16x4xf32>
    %26 = vector.shape_cast %25 : vector<1x16x4xf32> to vector<16x4xf32>
    %27 = vector.shape_cast %24 : vector<16x4xf32> to vector<1x16x4xf32>
    tpu.vector_store %arg7[%c0_14, %c0_15, %c0_16], %27 {strides = array<i32>} : memref<1x16x4xf32, #tpu.memory_space<vmem>>, vector<1x16x4xf32>,
    return
  }
  func.func @transform_0(%arg0: i32, %arg1: i32) -> (i32, i32, i32) {
    %c0_i32 = arith.constant 0 : i32
    %c0_i32_0 = arith.constant 0 : i32
    %c0_i32_1 = arith.constant 0 : i32
    return %arg0, %c0_i32, %c0_i32_0 : i32, i32, i32
  }
  func.func @transform_1(%arg0: i32, %arg1: i32) -> (i32, i32, i32) {
    %c0_i32 = arith.constant 0 : i32
    %c0_i32_0 = arith.constant 0 : i32
    %c0_i32_1 = arith.constant 0 : i32
    return %arg0, %c0_i32, %c0_i32_0 : i32, i32, i32
  }
  func.func @transform_2(%arg0: i32, %arg1: i32) -> (i32, i32, i32) {
    %c0_i32 = arith.constant 0 : i32
    %c0_i32_0 = arith.constant 0 : i32
    return %arg0, %arg1, %c0_i32 : i32, i32, i32
  }
  func.func @transform_3(%arg0: i32, %arg1: i32) -> (i32, i32) {
    %c0_i32 = arith.constant 0 : i32
    %c0_i32_0 = arith.constant 0 : i32
    %c0_i32_1 = arith.constant 0 : i32
    return %c0_i32, %c0_i32_0 : i32, i32
  }
  func.func @transform_4(%arg0: i32, %arg1: i32) -> (i32, i32) {
    %c0_i32 = arith.constant 0 : i32
    %c0_i32_0 = arith.constant 0 : i32
    %c0_i32_1 = arith.constant 0 : i32
    return %c0_i32, %c0_i32_0 : i32, i32
  }
  func.func @transform_5(%arg0: i32, %arg1: i32) -> (i32, i32, i32) {
    %c0_i32 = arith.constant 0 : i32
    %c0_i32_0 = arith.constant 0 : i32
    return %arg0, %c0_i32, %arg1 : i32, i32, i32
  }
}

</mosaic_0001>

<llo_original>
// kernel: tpu_custom_call.1
$region0: #{tpu_custom_call.1}
  #allocation0 [shape = 'u32[]', space=smem, size = 0x4, offset = 0x4, fixed_abs, tag = 'smem constant byte address 0x4 - core index']
  #allocation1 [shape = 'u32[72,128]{1,0:T(1,128)}', space=vmem, size = 0x9000, scoped, tag = 'internal scratch']
  %s0 = inlined_call_operand.vmem [shape: bf16[2,4,40], index: 0, kind: input, shape index: {}]
  %s1 = inlined_call_operand.vmem [shape: f32[2,4,32], index: 1, kind: input, shape index: {}]
  %s2 = inlined_call_operand.vmem [shape: bf16[2,4,40], index: 2, kind: input, shape index: {}]
  %s3 = inlined_call_operand.vmem [shape: bf16[40,32], index: 3, kind: input, shape index: {}]
  %s4 = inlined_call_operand.vmem [shape: f32[1,32], index: 4, kind: input, shape index: {}]
  %s5 = inlined_call_operand.vmem [shape: f32[2,16,4], index: 5, kind: output, shape index: {}]
  %s6 = sld [smem:[#allocation0]]
  $region53: #{tpu_custom_call.1} parent=0
    _
  %s8 = ssub.s32 1, %s6
  %s9 = scalar_select 0, %s8, %s6
  loop: start=0, step=1, limit=4
  $region2: #{tpu_custom_call.1} parent=0 // loop_pre_header
    _
  $region3: #{tpu_custom_call.1} parent=0 // loop_header
    %s11 = sphi 0, %s15
    %p12 = scmp.ge.s32.totalorder %s11, 4
    %s18 = sphi 0, %s30
    %s19 = sphi 0, %s26
    %s20 = sphi 0, %s18
    %s21 = sphi 0, %s19
    %s22 = sphi 0, %s20
    %s23 = sphi 0, %s21
    %s33 = sphi 0, %s35
    %s36 = sphi 0, %s33
    %s37 = sphi 0, %s36
    %s53 = sphi 0, %s37
    %s59 = sphi 0, %s61
    %s62 = sphi 0, %s59
    %s63 = sphi 0, %s62
    %s79 = sphi 0, %s63
    %s87 = sphi 0, %s89
    %s90 = sphi 0, %s87
    %s91 = sphi 0, %s90
    %s107 = sphi 0, %s91
    %s111 = sphi 0, %s111
    %s113 = sphi 0, %s111
    %s114 = sphi 0, %s113
    %s128 = sphi 0, %s114
    %s132 = sphi 0, %s132
    %s134 = sphi 0, %s132
    %s135 = sphi 0, %s134
    %s149 = sphi 0, %s135
    %s157 = sphi 0, %s159
    %s160 = sphi 0, %s157
    %s161 = sphi 0, %s160
    %s177 = sphi 0, %s161
  $region4: #{tpu_custom_call.1} parent=0 // loop_header_branch
    %14 = sbr.rel (%p12) target = $region8
  $region5: #{tpu_custom_call.1} parent=0 // loop_body
    %s16 = ssub.s32 %s11, 1
    %s17 = ssub.s32 %s11, 2
    %s24 = sadd.s32 1, %s19
    %p25 = scmp.ge.s32.totalorder %s24, 1
    %s26 = scalar_select %p25, 0, %s24
    %s27 = sadd.s32 1, %s18
    %s28 = scalar_select %p25, %s27, %s18
    %p29 = scmp.ge.s32.totalorder %s28, 2
    %s30 = scalar_select %p29, 0, %s28
    %s31 = ssub.s32 %s18, %s30
    %p32 = scmp.eq.s32.totalorder %s31, 0
    %s34 = sadd.s32 %s33, 1
    %s35 = scalar_select %p32, %s33, %s34
    %p38 = pneg %p32
    %p39 = scmp.eq.s32.totalorder %s11, 1
    %p40 = por %p38, %p39
    %p41 = scmp.ne.s32.totalorder %s33, %s36
    %p42 = scmp.eq.s32.totalorder %s11, 0
    %p43 = por %p41, %p42
    %p44 = scmp.ne.s32.totalorder %s33, %s36
    %p45 = scmp.eq.s32.totalorder %s16, 1
    %p46 = por %p44, %p45
    %p47 = scmp.ne.s32.totalorder %s36, %s37
    %p48 = scmp.eq.s32.totalorder %s16, 0
    %p49 = por %p47, %p48
    %p50 = scmp.ne.s32.totalorder %s36, %s37
    %p51 = scmp.eq.s32.totalorder %s17, 1
    %p52 = por %p50, %p51
    %p54 = scmp.ne.s32.totalorder %s37, %s53
    %p55 = scmp.eq.s32.totalorder %s17, 0
    %p56 = por %p54, %p55
    %s57 = ssub.s32 %s18, %s30
    %p58 = scmp.eq.s32.totalorder %s57, 0
    %s60 = sadd.s32 %s59, 1
    %s61 = scalar_select %p58, %s59, %s60
    %p64 = pneg %p58
    %p65 = scmp.eq.s32.totalorder %s11, 1
    %p66 = por %p64, %p65
    %p67 = scmp.ne.s32.totalorder %s59, %s62
    %p68 = scmp.eq.s32.totalorder %s11, 0
    %p69 = por %p67, %p68
    %p70 = scmp.ne.s32.totalorder %s59, %s62
    %p71 = scmp.eq.s32.totalorder %s16, 1
    %p72 = por %p70, %p71
    %p73 = scmp.ne.s32.totalorder %s62, %s63
    %p74 = scmp.eq.s32.totalorder %s16, 0
    %p75 = por %p73, %p74
    %p76 = scmp.ne.s32.totalorder %s62, %s63
    %p77 = scmp.eq.s32.totalorder %s17, 1
    %p78 = por %p76, %p77
    %p80 = scmp.ne.s32.totalorder %s63, %s79
    %p81 = scmp.eq.s32.totalorder %s17, 0
    %p82 = por %p80, %p81
    %s83 = ssub.s32 %s18, %s30
    %s84 = ssub.s32 %s19, %s26
    %s85 = sor.u32 %s83, %s84
    %p86 = scmp.eq.s32.totalorder %s85, 0
    %s88 = sadd.s32 %s87, 1
    %s89 = scalar_select %p86, %s87, %s88
    %p92 = pneg %p86
    %p93 = scmp.eq.s32.totalorder %s11, 1
    %p94 = por %p92, %p93
    %p95 = scmp.ne.s32.totalorder %s87, %s90
    %p96 = scmp.eq.s32.totalorder %s11, 0
    %p97 = por %p95, %p96
    %p98 = scmp.ne.s32.totalorder %s87, %s90
    %p99 = scmp.eq.s32.totalorder %s16, 1
    %p100 = por %p98, %p99
    %p101 = scmp.ne.s32.totalorder %s90, %s91
    %p102 = scmp.eq.s32.totalorder %s16, 0
    %p103 = por %p101, %p102
    %p104 = scmp.ne.s32.totalorder %s90, %s91
    %p105 = scmp.eq.s32.totalorder %s17, 1
    %p106 = por %p104, %p105
    %p108 = scmp.ne.s32.totalorder %s91, %s107
    %p109 = scmp.eq.s32.totalorder %s17, 0
    %p110 = por %p108, %p109
    %s112 = sadd.s32 %s111, 1
    %p115 = scmp.eq.s32.totalorder %s11, 1
    %p116 = scmp.ne.s32.totalorder %s111, %s113
    %p117 = scmp.eq.s32.totalorder %s11, 0
    %p118 = por %p116, %p117
    %p119 = scmp.ne.s32.totalorder %s111, %s113
    %p120 = scmp.eq.s32.totalorder %s16, 1
    %p121 = por %p119, %p120
    %p122 = scmp.ne.s32.totalorder %s113, %s114
    %p123 = scmp.eq.s32.totalorder %s16, 0
    %p124 = por %p122, %p123
    %p125 = scmp.ne.s32.totalorder %s113, %s114
    %p126 = scmp.eq.s32.totalorder %s17, 1
    %p127 = por %p125, %p126
    %p129 = scmp.ne.s32.totalorder %s114, %s128
    %p130 = scmp.eq.s32.totalorder %s17, 0
    %p131 = por %p129, %p130
    %s133 = sadd.s32 %s132, 1
    %p136 = scmp.eq.s32.totalorder %s11, 1
    %p137 = scmp.ne.s32.totalorder %s132, %s134
    %p138 = scmp.eq.s32.totalorder %s11, 0
    %p139 = por %p137, %p138
    %p140 = scmp.ne.s32.totalorder %s132, %s134
    %p141 = scmp.eq.s32.totalorder %s16, 1
    %p142 = por %p140, %p141
    %p143 = scmp.ne.s32.totalorder %s134, %s135
    %p144 = scmp.eq.s32.totalorder %s16, 0
    %p145 = por %p143, %p144
    %p146 = scmp.ne.s32.totalorder %s134, %s135
    %p147 = scmp.eq.s32.totalorder %s17, 1
    %p148 = por %p146, %p147
    %p150 = scmp.ne.s32.totalorder %s135, %s149
    %p151 = scmp.eq.s32.totalorder %s17, 0
    %p152 = por %p150, %p151
    %s153 = ssub.s32 %s18, %s30
    %s154 = ssub.s32 %s19, %s26
    %s155 = sor.u32 %s153, %s154
    %p156 = scmp.eq.s32.totalorder %s155, 0
    %s158 = sadd.s32 %s157, 1
    %s159 = scalar_select %p156, %s157, %s158
    %p162 = pneg %p156
    %p163 = scmp.eq.s32.totalorder %s11, 1
    %p164 = por %p162, %p163
    %p165 = scmp.ne.s32.totalorder %s157, %s160
    %p166 = scmp.eq.s32.totalorder %s11, 0
    %p167 = por %p165, %p166
    %p168 = scmp.ne.s32.totalorder %s157, %s160
    %p169 = scmp.eq.s32.totalorder %s16, 1
    %p170 = por %p168, %p169
    %p171 = scmp.ne.s32.totalorder %s160, %s161
    %p172 = scmp.eq.s32.totalorder %s16, 0
    %p173 = por %p171, %p172
    %p174 = scmp.ne.s32.totalorder %s160, %s161
    %p175 = scmp.eq.s32.totalorder %s17, 1
    %p176 = por %p174, %p175
    %p178 = scmp.ne.s32.totalorder %s161, %s177
    %p179 = scmp.eq.s32.totalorder %s17, 0
    %p180 = por %p178, %p179
    %p181 = scmp.le.s32.totalorder 1, %s11
    %p182 = scmp.lt.s32.totalorder %s11, 3
    %p183 = pnand %p181, %p182
    %p184 = pneg %p183
    // Predicated region
    $region9: #{tpu_custom_call.1} parent=5 // pred_check
      _
    $region10: #{tpu_custom_call.1} parent=5 // pred_check_branch
      %186 = sbr.rel (%p183) target = $region12
    $region11: #{tpu_custom_call.1} parent=5 // pred_region
      %s187 = ssub.s32 %s11, 1
      // Predicated region
      $region13: #{tpu_custom_call.1} parent=11 // pred_check
        %p188 = pneg %p124
      $region14: #{tpu_custom_call.1} parent=11 // pred_check_branch
        %190 = sbr.rel (%p188) target = $region16
      $region15: #{tpu_custom_call.1} parent=11 // pred_region
        _
      $region16: #{tpu_custom_call.1} parent=11 // pred_fallthru
        _
      // Predicated region
      $region17: #{tpu_custom_call.1} parent=11 // pred_check
        %p191 = pneg %p145
      $region18: #{tpu_custom_call.1} parent=11 // pred_check_branch
        %193 = sbr.rel (%p191) target = $region20
      $region19: #{tpu_custom_call.1} parent=11 // pred_region
        _
      $region20: #{tpu_custom_call.1} parent=11 // pred_fallthru
        _
    $region12: #{tpu_custom_call.1} parent=5 // pred_fallthru
      _
    %p194 = scmp.lt.s32.totalorder %s11, 2
    // Predicated region
    $region21: #{tpu_custom_call.1} parent=5 // pred_check
      %p195 = pneg %p194
    $region22: #{tpu_custom_call.1} parent=5 // pred_check_branch
      %197 = sbr.rel (%p195) target = $region24
    $region23: #{tpu_custom_call.1} parent=5 // pred_region
      // Predicated region
      $region25: #{tpu_custom_call.1} parent=23 // pred_check
        %p198 = pneg %p43
      $region26: #{tpu_custom_call.1} parent=23 // pred_check_branch
        %200 = sbr.rel (%p198) target = $region28
      $region27: #{tpu_custom_call.1} parent=23 // pred_region
        %p201 = scmp.lt.s32.totalorder %s18, 1
        %s202 = scalar_select %p201, %s18, 1
        %s203 = smul.addr %s202, 2
        %s204 = scalar_lea.vmem %s0, %s203
      $region28: #{tpu_custom_call.1} parent=23 // pred_fallthru
        _
      // Predicated region
      $region29: #{tpu_custom_call.1} parent=23 // pred_check
        %p205 = pneg %p69
      $region30: #{tpu_custom_call.1} parent=23 // pred_check_branch
        %207 = sbr.rel (%p205) target = $region32
      $region31: #{tpu_custom_call.1} parent=23 // pred_region
        %p208 = scmp.lt.s32.totalorder %s18, 1
        %s209 = scalar_select %p208, %s18, 1
        %s210 = smul.addr %s209, 4
        %s211 = scalar_lea.vmem %s1, %s210
      $region32: #{tpu_custom_call.1} parent=23 // pred_fallthru
        _
      // Predicated region
      $region33: #{tpu_custom_call.1} parent=23 // pred_check
        %p212 = pneg %p97
      $region34: #{tpu_custom_call.1} parent=23 // pred_check_branch
        %214 = sbr.rel (%p212) target = $region36
      $region35: #{tpu_custom_call.1} parent=23 // pred_region
        %p215 = scmp.lt.s32.totalorder %s18, 1
        %s216 = scalar_select %p215, %s18, 1
        %p217 = scmp.lt.s32.totalorder %s19, 0
        %s218 = scalar_select %p217, %s19, 0
        %s219 = sadd.s32 %s218, %s216
        %s220 = smul.addr %s219, 2
        %s221 = scalar_lea.vmem %s2, %s220
      $region36: #{tpu_custom_call.1} parent=23 // pred_fallthru
        _
    $region24: #{tpu_custom_call.1} parent=5 // pred_fallthru
      _
    %p222 = scmp.le.s32.totalorder 1, %s11
    %p223 = scmp.lt.s32.totalorder %s11, 3
    %p224 = pnand %p222, %p223
    %p225 = pneg %p224
    // Predicated region
    $region37: #{tpu_custom_call.1} parent=5 // pred_check
      _
    $region38: #{tpu_custom_call.1} parent=5 // pred_check_branch
      %227 = sbr.rel (%p224) target = $region40
    $region39: #{tpu_custom_call.1} parent=5 // pred_region
      %s228 = ssub.s32 %s11, 1
      %p229 = scmp.lt.s32.totalorder %s20, 1
      %s230 = scalar_select %p229, %s20, 1
      %s231 = smul.addr %s230, 2
      %s232 = scalar_lea.vmem %s0, %s231
      %p233 = pneg %p49
      %p234 = pneg %p46
      %p235 = scmp.lt.s32.totalorder %s20, 1
      %s236 = scalar_select %p235, %s20, 1
      %s237 = smul.addr %s236, 4
      %s238 = scalar_lea.vmem %s1, %s237
      %p239 = pneg %p75
      %p240 = pneg %p72
      %p241 = scmp.lt.s32.totalorder %s20, 1
      %s242 = scalar_select %p241, %s20, 1
      %p243 = scmp.lt.s32.totalorder %s21, 0
      %s244 = scalar_select %p243, %s21, 0
      %s245 = sadd.s32 %s244, %s242
      %s246 = smul.addr %s245, 2
      %s247 = scalar_lea.vmem %s2, %s246
      %p248 = pneg %p103
      %p249 = pneg %p100
      %p250 = pneg %p124
      %p251 = pneg %p121
      %p252 = pneg %p145
      %p253 = pneg %p142
      %p254 = pneg %p173
      %p255 = pneg %p170
      %p256 = scmp.lt.s32.totalorder %s20, 1
      %s257 = scalar_select %p256, %s20, 1
      %p258 = scmp.lt.s32.totalorder %s21, 0
      %s259 = scalar_select %p258, %s21, 0
      %s260 = smul.addr %s257, 2
      %s261 = sadd.s32 %s259, %s260
      %s262 = smul.addr %s261, 8
      %s263 = scalar_lea.vmem %s5, %s262
      %p264 = scmp.lt.s32.totalorder %s20, 1
      %s265 = scalar_select %p264, %s20, 1
      %s266 = smul.addr %s265, 2
      %s267 = scalar_lea.vmem %s0, %s266
      %p268 = scmp.lt.s32.totalorder %s20, 1
      %s269 = scalar_select %p268, %s20, 1
      %s270 = smul.addr %s269, 4
      %s271 = scalar_lea.vmem %s1, %s270
      %p272 = scmp.lt.s32.totalorder %s20, 1
      %s273 = scalar_select %p272, %s20, 1
      %p274 = scmp.lt.s32.totalorder %s21, 0
      %s275 = scalar_select %p274, %s21, 0
      %s276 = sadd.s32 %s275, %s273
      %s277 = smul.addr %s276, 2
      %s278 = scalar_lea.vmem %s2, %s277
      %p279 = scmp.lt.s32.totalorder %s20, 1
      %s280 = scalar_select %p279, %s20, 1
      %p281 = scmp.lt.s32.totalorder %s21, 0
      %s282 = scalar_select %p281, %s21, 0
      %s283 = smul.addr %s280, 2
      %s284 = sadd.s32 %s282, %s283
      %s285 = smul.addr %s284, 8
      %s286 = scalar_lea.vmem %s5, %s285
      %v288 = vld [vmem:[%s3] sm:$0xf]
      %v289 = vld [vmem:[%s3 + $0x4] sm:$0xf]
      %v290 = vld [vmem:[%s3 + $0x8] sm:$0xf]
      %v291 = vld [vmem:[%s3 + $0xc] sm:$0xf]
      %v292 = vld [vmem:[%s3 + $0x10] sm:$0xf]
      %v293 = vld [vmem:[%s4] sm:$0x1]
      %v294 = vld [vmem:[%s267] sm:$0x3]
      %v296 = vperm.slane %v293, 0
      %v303 = vunpack.c.l.b16 %v288
      %v304 = vunpack.c.l.b16 %v289
      %v305 = vunpack.c.l.b16 %v290
      %v306 = vunpack.c.l.b16 %v291
      %v307 = vunpack.c.l.b16 %v292
      %v308 = vpack.c.b16 %v304, %v303
      %v309 = vpack.c.b16 %v306, %v305
      %v310 = vpack.c.b16 %v307, %v307
      %vm313 = vcmask 326656
      %v315 = vsel %vm313, %v294, 0
      %vm317 = vcmask 1043456
      %v319 = vsel %vm317, %v310, 0
      %321 = vmatpush.bf16.msra.mxu0 0
      %322 = vmatpush.bf16.msra.mxu0 0
      %323 = vmatpush.bf16.msra.mxu0 0
      %324 = vmatpush.bf16.msra.mxu0 0
      %325 = vmatpush.bf16.msra.mxu0 0
      %326 = vmatpush.bf16.msra.mxu0 %v319
      %327 = vmatpush.bf16.msra.mxu0 %v309
      %328 = vmatpush.bf16.msra.mxu0 %v308
      %329 = vmatmul.bf16.gmra.mxu0 %v315
      %v330 = vpop.f32.mrf.mxu0
      %v331 = vadd.f32 %v296, %v330
      %v332 = vpop.f32.mrf.mxu0
      %333 = vdwg.mxu0
      %v334 = vtanh.pop %v331
      %v335 = vld [vmem:[%s278] sm:$0x3]
      %v337 = vsel %vm313, %v335, 0
      %339 = vmatpush.bf16.msra.mxu0 0
      %340 = vmatpush.bf16.msra.mxu0 0
      %341 = vmatpush.bf16.msra.mxu0 0
      %342 = vmatpush.bf16.msra.mxu0 0
      %343 = vmatpush.bf16.msra.mxu0 0
      %344 = vmatpush.bf16.msra.mxu0 %v319
      %345 = vmatpush.bf16.msra.mxu0 %v309
      %346 = vmatpush.bf16.msra.mxu0 %v308
      %347 = vmatmul.bf16.gmra.mxu0 %v337
      %v348 = vpop.f32.mrf.mxu0
      %v349 = vadd.f32 %v296, %v348
      %v350 = vpop.f32.mrf.mxu0
      %351 = vdwg.mxu0
      %v352 = vtanh.pop %v349
      %v353 = vld [vmem:[%s271] sm:$0xf]
      %v355 = vrot.slane %v353, 1
      %v356 = vrot.slane %v353, 2
      %v357 = vrot.slane %v353, 3
      %v358 = vperm.slane %v353, 0
      %v359 = vperm.slane %v355, 0
      %v360 = vperm.slane %v356, 0
      %v361 = vperm.slane %v357, 0
      %v366 = vmul.f32 %v358, %v334
      %v367 = vmul.f32 %v359, %v334
      %v368 = vmul.f32 %v360, %v334
      %v369 = vmul.f32 %v361, %v334
      %374 = vst [vmem:[#allocation1] ss:$2 sm:$0xff] %v366
      %s375 = scalar_lea.vmem [#allocation1], 1
      %376 = vst [vmem:[%s375] ss:$2 sm:$0xff] %v367
      %s377 = scalar_lea.vmem [#allocation1], 16
      %378 = vst [vmem:[%s377] ss:$2 sm:$0xff] %v368
      %s379 = scalar_lea.vmem [#allocation1], 17
      %380 = vst [vmem:[%s379] ss:$2 sm:$0xff] %v369
      %v381 = vld.sshfl [vmem:[#allocation1] sm:$0xff pattern:$0x75316420]
      %v382 = vld.sshfl [vmem:[#allocation1 + $0x10] sm:$0xff pattern:$0x75316420]
      %v385 = vpack.c.bf16 %v382, %v381
      %v386 = vpack.c.bf16 %v352, %v352
      %vm387 = vcmask 261120
      %v389 = vsel %vm387, %v385, 0
      %v392 = vsel %vm387, %v386, 0
      %394 = vmatpush.bf16.xpose.msra.mxu0 0
      %395 = vmatpush.bf16.xpose.msra.mxu0 0
      %396 = vmatpush.bf16.xpose.msra.mxu0 0
      %397 = vmatpush.bf16.xpose.msra.mxu0 0
      %398 = vmatpush.bf16.xpose.msra.mxu0 0
      %399 = vmatpush.bf16.xpose.msra.mxu0 0
      %400 = vmatpush.bf16.xpose.msra.mxu0 0
      %401 = vmatpush.bf16.xpose.msra.mxu0 %v392
      %402 = vmatmul.bf16.gmra.mxu0 %v389
      %v403 = vpop.f32.mrf.mxu0
      %v404 = vadd.f32 0.0, %v403
      %v405 = vpop.f32.mrf.mxu0
      %v406 = vadd.f32 0.0, %v405
      %407 = vdwg.mxu0
      %vm408 = vcmask 31744
      %409 = vst.msk [vmem:[%s286] sm:$0xff] %vm408, %v404
      %410 = vst.msk [vmem:[%s286 + $0x8] sm:$0xff] %vm408, %v406
      %p411 = scmp.lt.s32.totalorder %s20, 1
      %s412 = scalar_select %p411, %s20, 1
      %p413 = scmp.lt.s32.totalorder %s21, 0
      %s414 = scalar_select %p413, %s21, 0
      %s415 = smul.addr %s412, 2
      %s416 = sadd.s32 %s414, %s415
      %s417 = smul.addr %s416, 8
      %s418 = scalar_lea.vmem %s5, %s417
      // Predicated region
      $region41: #{tpu_custom_call.1} parent=39 // pred_check
        %p419 = pneg %p170
      $region42: #{tpu_custom_call.1} parent=39 // pred_check_branch
        %421 = sbr.rel (%p419) target = $region44
      $region43: #{tpu_custom_call.1} parent=39 // pred_region
        _
      $region44: #{tpu_custom_call.1} parent=39 // pred_fallthru
        _
    $region40: #{tpu_custom_call.1} parent=5 // pred_fallthru
      _
    %p422 = scmp.le.s32.totalorder 2, %s11
    // Predicated region
    $region45: #{tpu_custom_call.1} parent=5 // pred_check
      %p423 = pneg %p422
    $region46: #{tpu_custom_call.1} parent=5 // pred_check_branch
      %425 = sbr.rel (%p423) target = $region48
    $region47: #{tpu_custom_call.1} parent=5 // pred_region
      %s426 = ssub.s32 %s11, 2
      // Predicated region
      $region49: #{tpu_custom_call.1} parent=47 // pred_check
        %p427 = pneg %p176
      $region50: #{tpu_custom_call.1} parent=47 // pred_check_branch
        %429 = sbr.rel (%p427) target = $region52
      $region51: #{tpu_custom_call.1} parent=47 // pred_region
        %p430 = scmp.lt.s32.totalorder %s22, 1
        %s431 = scalar_select %p430, %s22, 1
        %p432 = scmp.lt.s32.totalorder %s23, 0
        %s433 = scalar_select %p432, %s23, 0
        %s434 = smul.addr %s431, 2
        %s435 = sadd.s32 %s433, %s434
        %s436 = smul.addr %s435, 8
        %s437 = scalar_lea.vmem %s5, %s436
      $region52: #{tpu_custom_call.1} parent=47 // pred_fallthru
        _
    $region48: #{tpu_custom_call.1} parent=5 // pred_fallthru
      _
  $region6: #{tpu_custom_call.1} parent=0 // loop_footer
    %s15 = sadd.s32 1, %s11
  $region7: #{tpu_custom_call.1} parent=0 // loop_footer_branch
    %10 = sbr.rel target = $region3
  $region8: #{tpu_custom_call.1} parent=0 // loop_exit
    _

</llo_original>
